<compile_context>
chip_gen: v7x
topology: tpu7x:2x2x1
jax: 0.10.0
libtpu: 0.0.40
codegen_flags: <defaults>
</compile_context>

<pallas_src>
import functools

import jax
import jax.numpy as jnp
from jax import lax
from jax.experimental import pallas as pl
from jax.experimental.pallas import tpu as pltpu


def _round_up(x, m):
    return ((x + m - 1) // m) * m


# --------------------------------------------------------------------------
# Kernel
# --------------------------------------------------------------------------
def _critic_kernel(x_ref, w1_ref, w2_ref, w3_ref, b_ref, out_ref, *, E, Z, HALF):
    # x: (B, 2S+A) f32 = [obs | action | goal]; cast once to bf16 for the MXU.
    x = x_ref[...].astype(jnp.bfloat16)

    b1 = b_ref[0:1, :]          # (1, P) f32; implicit sublane broadcast on add
    b2 = b_ref[1:2, :]
    b3 = b_ref[2:3, :]

    def mm(a, w):               # bf16 x bf16 operands, f32 accumulate, no .T
        return lax.dot_general(a, w, (((1,), (0,)), ((), ())),
                               preferred_element_type=jnp.float32)

    # Fused 3-layer MLP.  Lanes [0, HALF) carry all sa ensemble members,
    # lanes [HALF, 2*HALF) carry all g ensemble members; padding lanes
    # (zero weights + zero bias, ReLU(0)=0) stay exactly 0 through all layers.
    h = jnp.maximum(mm(x, w1_ref[...]) + b1, 0.0)                       # (B, P)
    h = jnp.maximum(mm(h.astype(jnp.bfloat16), w2_ref[...]) + b2, 0.0)  # (B, P)
    r = mm(h.astype(jnp.bfloat16), w3_ref[...]) + b3                    # (B, P)

    # TODO(synk): repr_norm=True branch (L2-normalized reprs) not wired in;
    #             module default is repr_norm=False.

    # combine_repr: out[e,i,j] = sum_z sa_repr[e,i,z] * g_repr[e,j,z]
    # Contract dim 1 of both operands -> no transpose.  E=2, unrolled at trace.
    for e in range(E):
        sa_e = r[:, e * Z:(e + 1) * Z].astype(jnp.bfloat16)              # (B, Z)
        g_e = r[:, HALF + e * Z:HALF + (e + 1) * Z].astype(jnp.bfloat16)  # (B, Z)
        out_ref[e] = lax.dot_general(sa_e, g_e, (((1,), (1,)), ((), ())),
                                     preferred_element_type=jnp.float32)


# --------------------------------------------------------------------------
# One-time parameter re-layout (outside the hot path)
# --------------------------------------------------------------------------
def prepare_params(params, *, obs_dim, act_dim, hidden, repr_dim):
    """Pack the 12 per-member weight/bias tensors into 4 lane-dense slabs.

    Lane layout (P lanes total):
      lanes [e*H, (e+1)*H)            : sa ensemble member e (hidden)
      lanes [HALF + e*H, ...)         : g  ensemble member e (hidden)
      lanes [e*Z, (e+1)*Z)            : sa member e representation (layer 3)
      lanes [HALF + e*Z, ...)         : g  member e representation (layer 3)

    Returns:
      w1: (2S+A, P) bf16  rows = [W1_sa obs rows ; W1_sa act rows ; W1_g rows]
      w2: (P, P)    bf16  block-diagonal: E sa blocks then E g blocks
      w3: (P, P)    bf16  block-diagonal: E sa blocks then E g blocks
      b : (8, P)    f32   rows = [b1, b2, b3, 0...] (sa + g fused per row)
    All padding is zero so pad lanes propagate exact zeros through the MLP.
    """
    S, A, H, Z = obs_dim, act_dim, hidden, repr_dim
    E = params["w1_sa"].shape[0]
    HALF = max(E * H, E * Z)
    P = _round_up(2 * HALF, 128)

    w1 = jnp.zeros((2 * S + A, P), jnp.float32)
    w2 = jnp.zeros((P, P), jnp.float32)
    w3 = jnp.zeros((P, P), jnp.float32)
    b = jnp.zeros((8, P), jnp.float32)

    for e in range(E):
        # layer 1: obs+act rows feed sa lanes, goal rows feed g lanes
        w1 = w1.at[0:S + A, e * H:(e + 1) * H].set(params["w1_sa"][e])
        w1 = w1.at[S + A:2 * S + A,
                   HALF + e * H:HALF + (e + 1) * H].set(params["w1_g"][e])
        # layers 2/3: block-diagonal over (branch, ensemble member)
        w2 = w2.at[e * H:(e + 1) * H, e * H:(e + 1) * H].set(params["w2_sa"][e])
        w2 = w2.at[HALF + e * H:HALF + (e + 1) * H,
                   HALF + e * H:HALF + (e + 1) * H].set(params["w2_g"][e])
        w3 = w3.at[e * H:(e + 1) * H, e * Z:(e + 1) * Z].set(params["w3_sa"][e])
        w3 = w3.at[HALF + e * H:HALF + (e + 1) * H,
                   HALF + e * Z:HALF + (e + 1) * Z].set(params["w3_g"][e])
        # biases
        b = b.at[0, e * H:(e + 1) * H].set(params["b1_sa"][e, 0])
        b = b.at[0, HALF + e * H:HALF + (e + 1) * H].set(params["b1_g"][e, 0])
        b = b.at[1, e * H:(e + 1) * H].set(params["b2_sa"][e, 0])
        b = b.at[1, HALF + e * H:HALF + (e + 1) * H].set(params["b2_g"][e, 0])
        b = b.at[2, e * Z:(e + 1) * Z].set(params["b3_sa"][e, 0])
        b = b.at[2, HALF + e * Z:HALF + (e + 1) * Z].set(params["b3_g"][e, 0])

    return dict(
        w1=w1.astype(jnp.bfloat16),
        w2=w2.astype(jnp.bfloat16),
        w3=w3.astype(jnp.bfloat16),
        b=b,
        E=E, P=P, HALF=HALF, S=S, A=A, H=H, Z=Z)


# --------------------------------------------------------------------------
# Wrapper
# --------------------------------------------------------------------------
def contrastive_goal_critic_forward(obs, action, goal, prep):
    """obs: (B, S), action: (B, A), goal: (B, S) -> logits (E, B, B)."""
    B = obs.shape[0]
    E, Z, HALF = prep["E"], prep["Z"], prep["HALF"]

    # Single lane-contiguous input slab; removes 2 DMAs and 2 masked loads.
    x = jnp.concatenate([obs, action, goal], axis=-1)    # (B, 2S+A)

    kernel = functools.partial(_critic_kernel, E=E, Z=Z, HALF=HALF)
    vmem = lambda: pl.BlockSpec(memory_space=pltpu.MemorySpace.VMEM)

    # No grid at this size: one launch, whole arrays resident in VMEM.
    return pl.pallas_call(
        kernel,
        out_shape=jax.ShapeDtypeStruct((E, B, B), jnp.float32),
        in_specs=[vmem() for _ in range(5)],
        out_specs=vmem(),
    )(x, prep["w1"], prep["w2"], prep["w3"], prep["b"])


# --------------------------------------------------------------------------
# Pure-JAX reference (operates on the original, unpacked params)
# --------------------------------------------------------------------------
def _reference_forward(obs, action, goal, params, *, match_bf16=False):
    """match_bf16=True applies the same bf16 operand rounding as the kernel
    (weights + matmul inputs), isolating packing/layout bugs from bf16
    quantization error.  match_bf16=False is the exact f32 module semantics."""
    if match_bf16:
        q = lambda t: t.astype(jnp.bfloat16).astype(jnp.float32)
    else:
        q = lambda t: t

    sa_in = jnp.concatenate([obs, action], axis=-1)

    def mlp(x, w1, b1, w2, b2, w3, b3):
        h = jnp.maximum(jnp.einsum("bd,edh->ebh", q(x), q(w1)) + b1, 0.0)
        h = jnp.maximum(jnp.einsum("ebd,edh->ebh", q(h), q(w2)) + b2, 0.0)
        return jnp.einsum("ebd,edh->ebh", q(h), q(w3)) + b3

    sa_repr = mlp(sa_in, params["w1_sa"], params["b1_sa"], params["w2_sa"],
                  params["b2_sa"], params["w3_sa"], params["b3_sa"])
    g_repr = mlp(goal, params["w1_g"], params["b1_g"], params["w2_g"],
                 params["b2_g"], params["w3_g"], params["b3_g"])
    return jnp.einsum("eiz,ejz->eij", q(sa_repr), q(g_repr))


def init_params(key, *, ensemble_size, in_sa, in_g, hidden, repr_dim):
    ks = jax.random.split(key, 12)
    E, H, Z = ensemble_size, hidden, repr_dim

    def lin(k, fan_in, fan_out):
        scale = 1.0 / jnp.sqrt(jnp.float32(fan_in))
        return jax.random.uniform(k, (E, fan_in, fan_out), jnp.float32, -scale, scale)

    def bias(k, fan_out):
        return jax.random.uniform(k, (E, 1, fan_out), jnp.float32, -0.05, 0.05)

    return {
        "w1_sa": lin(ks[0], in_sa, H), "b1_sa": bias(ks[1], H),
        "w2_sa": lin(ks[2], H, H),     "b2_sa": bias(ks[3], H),
        "w3_sa": lin(ks[4], H, Z),     "b3_sa": bias(ks[5], Z),
        "w1_g":  lin(ks[6], in_g, H),  "b1_g":  bias(ks[7], H),
        "w2_g":  lin(ks[8], H, H),     "b2_g":  bias(ks[9], H),
        "w3_g":  lin(ks[10], H, Z),    "b3_g":  bias(ks[11], Z),
    }


if __name__ == "__main__":
    # observation_space.shape[0] = 32  ->  state / goal dim S = 16
    # action_space.shape[0]      = 8
    # repr_dim = 32, hidden = 32, ensemble_size = 2, batch B = 8
    B, S, A, H, Z, E = 8, 16, 8, 32, 32, 2

    key = jax.random.PRNGKey(0)
    k_obs, k_act, k_goal, k_params = jax.random.split(key, 4)
    obs = jax.random.normal(k_obs, (B, S), jnp.float32)
    action = jax.random.normal(k_act, (B, A), jnp.float32)
    goal = jax.random.normal(k_goal, (B, S), jnp.float32)

    params = init_params(k_params, ensemble_size=E, in_sa=S + A, in_g=S,
                         hidden=H, repr_dim=Z)
    prep = prepare_params(params, obs_dim=S, act_dim=A, hidden=H, repr_dim=Z)

    out = jax.block_until_ready(
        contrastive_goal_critic_forward(obs, action, goal, prep))
    assert out.shape == (E, B, B), out.shape

    # Tight check vs a reference that applies the same bf16 operand rounding:
    # verifies the lane-packing / block-diagonal layout exactly.
    ref_bf16 = jax.block_until_ready(
        _reference_forward(obs, action, goal, params, match_bf16=True))
    err_bf16 = float(jnp.max(jnp.abs(out - ref_bf16)))
    assert jnp.allclose(out, ref_bf16, atol=2e-3, rtol=2e-3), err_bf16

    # Coarse check vs exact f32 module semantics: absorbs the intended bf16
    # weight/operand quantization (~1e-3 at this scale).
    ref_f32 = jax.block_until_ready(
        _reference_forward(obs, action, goal, params, match_bf16=False))
    err_f32 = float(jnp.max(jnp.abs(out - ref_f32)))
    assert jnp.allclose(out, ref_f32, atol=2e-2, rtol=2e-2), err_f32

    print("KERNEL_OK")
</pallas_src>

<mosaic_0001>
module attributes {stable_mosaic.version = 11 : i64} {
  func.func @_critic_kernel(%arg0: memref<8x40xf32, #tpu.memory_space<vmem>>, %arg1: memref<40x128xbf16, #tpu.memory_space<vmem>>, %arg2: memref<128x128xbf16, #tpu.memory_space<vmem>>, %arg3: memref<128x128xbf16, #tpu.memory_space<vmem>>, %arg4: memref<8x128xf32, #tpu.memory_space<vmem>>, %arg5: memref<2x8x8xf32, #tpu.memory_space<vmem>>) attributes {dimension_semantics = [], scalar_prefetch = 0 : i64, scratch_operands = 0 : i64, tpu.core_type = #tpu.core_type<tc>} {
    %c0 = arith.constant 0 : index
    %c0_0 = arith.constant 0 : index
    %0 = vector.load %arg0[%c0, %c0_0] : memref<8x40xf32, #tpu.memory_space<vmem>>, vector<8x40xf32>
    %1 = arith.truncf %0 : vector<8x40xf32> to vector<8x40xbf16>
    %c0_1 = arith.constant 0 : index
    %c0_2 = arith.constant 0 : index
    %2 = vector.load %arg4[%c0_1, %c0_2] : memref<8x128xf32, #tpu.memory_space<vmem>>, vector<1x128xf32>
    %c1 = arith.constant 1 : index
    %c0_3 = arith.constant 0 : index
    %3 = vector.load %arg4[%c1, %c0_3] : memref<8x128xf32, #tpu.memory_space<vmem>>, vector<1x128xf32>
    %c2 = arith.constant 2 : index
    %c0_4 = arith.constant 0 : index
    %4 = vector.load %arg4[%c2, %c0_4] : memref<8x128xf32, #tpu.memory_space<vmem>>, vector<1x128xf32>
    %c0_5 = arith.constant 0 : index
    %c0_6 = arith.constant 0 : index
    %5 = vector.load %arg1[%c0_5, %c0_6] : memref<40x128xbf16, #tpu.memory_space<vmem>>, vector<40x128xbf16>
    %cst = arith.constant dense<0.000000e+00> : vector<8x128xf32>
    %6 = tpu.matmul %1, %5, %cst {dimension_numbers = #tpu.dot_dimension_numbers<[1], [0], [0], [1], [0, 0, 1, 1], [], []>} : vector<8x40xbf16>, vector<40x128xbf16>, vector<8x128xf32> -> vector<8x128xf32>
    %7 = vector.broadcast %2 : vector<1x128xf32> to vector<8x128xf32>
    %8 = arith.addf %6, %7 : vector<8x128xf32>
    %cst_7 = arith.constant 0.000000e+00 : f32
    %9 = vector.broadcast %cst_7 : f32 to vector<8x128xf32>
    %10 = arith.maximumf %8, %9 : vector<8x128xf32>
    %11 = arith.truncf %10 : vector<8x128xf32> to vector<8x128xbf16>
    %c0_8 = arith.constant 0 : index
    %c0_9 = arith.constant 0 : index
    %12 = vector.load %arg2[%c0_8, %c0_9] : memref<128x128xbf16, #tpu.memory_space<vmem>>, vector<128x128xbf16>
    %cst_10 = arith.constant dense<0.000000e+00> : vector<8x128xf32>
    %13 = tpu.matmul %11, %12, %cst_10 {dimension_numbers = #tpu.dot_dimension_numbers<[1], [0], [0], [1], [0, 0, 1, 1], [], []>} : vector<8x128xbf16>, vector<128x128xbf16>, vector<8x128xf32> -> vector<8x128xf32>
    %14 = vector.broadcast %3 : vector<1x128xf32> to vector<8x128xf32>
    %15 = arith.addf %13, %14 : vector<8x128xf32>
    %cst_11 = arith.constant 0.000000e+00 : f32
    %16 = vector.broadcast %cst_11 : f32 to vector<8x128xf32>
    %17 = arith.maximumf %15, %16 : vector<8x128xf32>
    %18 = arith.truncf %17 : vector<8x128xf32> to vector<8x128xbf16>
    %c0_12 = arith.constant 0 : index
    %c0_13 = arith.constant 0 : index
    %19 = vector.load %arg3[%c0_12, %c0_13] : memref<128x128xbf16, #tpu.memory_space<vmem>>, vector<128x128xbf16>
    %cst_14 = arith.constant dense<0.000000e+00> : vector<8x128xf32>
    %20 = tpu.matmul %18, %19, %cst_14 {dimension_numbers = #tpu.dot_dimension_numbers<[1], [0], [0], [1], [0, 0, 1, 1], [], []>} : vector<8x128xbf16>, vector<128x128xbf16>, vector<8x128xf32> -> vector<8x128xf32>
    %21 = vector.broadcast %4 : vector<1x128xf32> to vector<8x128xf32>
    %22 = arith.addf %20, %21 : vector<8x128xf32>
    %23 = vector.extract_strided_slice %22 {offsets = [0, 0], sizes = [8, 32], strides = [1, 1]} : vector<8x128xf32> to vector<8x32xf32>
    %24 = arith.truncf %23 : vector<8x32xf32> to vector<8x32xbf16>
    %25 = vector.extract_strided_slice %22 {offsets = [0, 64], sizes = [8, 32], strides = [1, 1]} : vector<8x128xf32> to vector<8x32xf32>
    %26 = arith.truncf %25 : vector<8x32xf32> to vector<8x32xbf16>
    %cst_15 = arith.constant dense<0.000000e+00> : vector<8x8xf32>
    %27 = tpu.matmul %24, %26, %cst_15 {dimension_numbers = #tpu.dot_dimension_numbers<[1], [1], [0], [0], [0, 0, 1, 0], [], []>} : vector<8x32xbf16>, vector<8x32xbf16>, vector<8x8xf32> -> vector<8x8xf32>
    %c0_16 = arith.constant 0 : index
    %c0_17 = arith.constant 0 : index
    %c0_18 = arith.constant 0 : index
    %28 = vector.load %arg5[%c0_16, %c0_17, %c0_18] : memref<2x8x8xf32, #tpu.memory_space<vmem>>, vector<1x8x8xf32>
    %29 = vector.shape_cast %28 : vector<1x8x8xf32> to vector<8x8xf32>
    %30 = vector.shape_cast %27 : vector<8x8xf32> to vector<1x8x8xf32>
    tpu.vector_store %arg5[%c0_16, %c0_17, %c0_18], %30 {strides = array<i32>} : memref<2x8x8xf32, #tpu.memory_space<vmem>>, vector<1x8x8xf32>,
    %31 = vector.extract_strided_slice %22 {offsets = [0, 32], sizes = [8, 32], strides = [1, 1]} : vector<8x128xf32> to vector<8x32xf32>
    %32 = arith.truncf %31 : vector<8x32xf32> to vector<8x32xbf16>
    %33 = vector.extract_strided_slice %22 {offsets = [0, 96], sizes = [8, 32], strides = [1, 1]} : vector<8x128xf32> to vector<8x32xf32>
    %34 = arith.truncf %33 : vector<8x32xf32> to vector<8x32xbf16>
    %cst_19 = arith.constant dense<0.000000e+00> : vector<8x8xf32>
    %35 = tpu.matmul %32, %34, %cst_19 {dimension_numbers = #tpu.dot_dimension_numbers<[1], [1], [0], [0], [0, 0, 1, 0], [], []>} : vector<8x32xbf16>, vector<8x32xbf16>, vector<8x8xf32> -> vector<8x8xf32>
    %c1_20 = arith.constant 1 : index
    %c0_21 = arith.constant 0 : index
    %c0_22 = arith.constant 0 : index
    %36 = vector.load %arg5[%c1_20, %c0_21, %c0_22] : memref<2x8x8xf32, #tpu.memory_space<vmem>>, vector<1x8x8xf32>
    %37 = vector.shape_cast %36 : vector<1x8x8xf32> to vector<8x8xf32>
    %38 = vector.shape_cast %35 : vector<8x8xf32> to vector<1x8x8xf32>
    tpu.vector_store %arg5[%c1_20, %c0_21, %c0_22], %38 {strides = array<i32>} : memref<2x8x8xf32, #tpu.memory_space<vmem>>, vector<1x8x8xf32>,
    return
  }
}

</mosaic_0001>

<llo_original>
// kernel: tpu_custom_call.1
$region0: #{tpu_custom_call.1}
  #allocation0 [shape = 'u32[]', space=smem, size = 0x4, offset = 0x4, fixed_abs, tag = 'smem constant byte address 0x4 - core index']
  #allocation1 [shape = 'u32[144,128]{1,0:T(1,128)}', space=vmem, size = 0x12000, scoped, tag = 'internal scratch']
  %s0 = inlined_call_operand.hbm [shape: f32[8,40], index: 0, kind: input, shape index: {}]
  %s1 = inlined_call_operand.hbm [shape: bf16[40,128], index: 1, kind: input, shape index: {}]
  %s2 = inlined_call_operand.hbm [shape: bf16[128,128], index: 2, kind: input, shape index: {}]
  %s3 = inlined_call_operand.hbm [shape: bf16[128,128], index: 3, kind: input, shape index: {}]
  %s4 = inlined_call_operand.vmem [shape: f32[8,128], index: 4, kind: input, shape index: {}]
  %s5 = inlined_call_operand.hbm [shape: f32[2,8,8], index: 5, kind: output, shape index: {}]
  %s6 = sld [smem:[#allocation0]]
  $region46: #{tpu_custom_call.1} parent=0
    _
  %s8 = ssub.s32 1, %s6
  %s9 = scalar_select 0, %s8, %s6
  $region1: #{tpu_custom_call.1} parent=0
    #allocation2 [shape = 'u8[4096]{0}', space=vmem, size = 0x1000, scoped, tag = 'input window, operand 0, single buffered']
    #allocation3 [shape = 's32[1]{0}', space=sflag, size = 0x4, scoped, tag = 'scoped memory for tpu_custom_call.1']
    #allocation4 [shape = 's32[1]{0}', space=sflag, size = 0x4, scoped, tag = 'scoped memory for tpu_custom_call.1']
    #allocation5 [shape = 'u8[10240]{0}', space=vmem, size = 0x2800, scoped, tag = 'input window, operand 1, single buffered']
    #allocation6 [shape = 's32[1]{0}', space=sflag, size = 0x4, scoped, tag = 'scoped memory for tpu_custom_call.1']
    #allocation7 [shape = 'u8[32768]{0}', space=vmem, size = 0x8000, scoped, tag = 'input window, operand 2, single buffered']
    #allocation8 [shape = 'u8[32768]{0}', space=vmem, size = 0x8000, scoped, tag = 'input window, operand 3, single buffered']
    #allocation9 [shape = 's32[1]{0}', space=sflag, size = 0x4, scoped, tag = 'scoped memory for tpu_custom_call.1']
    #allocation10 [shape = 'u8[8192]{0}', space=vmem, size = 0x2000, scoped, tag = 'output window, operand 0, single buffered']
    %10 = vsyncpa [#allocation3], 0
    %11 = vsyncpa [#allocation6], 0
    %12 = vsyncpa [#allocation9], 0
    %13 = vsyncpa [#allocation4], 0
    // Predicated region
    $region2: #{tpu_custom_call.1} parent=1 // pred_check
      _
    $region3: #{tpu_custom_call.1} parent=1 // pred_check_branch
      %15 = sbr.rel (0) target = $region5
    $region4: #{tpu_custom_call.1} parent=1 // pred_region
      %s17 = ssub.s32 128, 128
      %18 = vsyncadd [#allocation3], %s17
      %s20 = sshll.u32 [#allocation2], 4
      %s21 = int_to_ptr.vmem [resolvable:$true] %s20
      %23 = dma.hbm_to_vmem [thread:$0]  %s0, 128, %s21, [#allocation3]
    $region5: #{tpu_custom_call.1} parent=1 // pred_fallthru
      _
    // Predicated region
    $region6: #{tpu_custom_call.1} parent=1 // pred_check
      _
    $region7: #{tpu_custom_call.1} parent=1 // pred_check_branch
      %25 = sbr.rel (0) target = $region9
    $region8: #{tpu_custom_call.1} parent=1 // pred_region
      %s27 = ssub.s32 320, 320
      %28 = vsyncadd [#allocation6], %s27
      %s29 = sshll.u32 [#allocation5], 4
      %s30 = int_to_ptr.vmem [resolvable:$true] %s29
      %35 = dma.hbm_to_vmem [thread:$0]  %s1, 320, %s30, [#allocation6], 64, 64, 4
    $region9: #{tpu_custom_call.1} parent=1 // pred_fallthru
      _
    // Predicated region
    $region10: #{tpu_custom_call.1} parent=1 // pred_check
      _
    $region11: #{tpu_custom_call.1} parent=1 // pred_check_branch
      %37 = sbr.rel (0) target = $region13
    $region12: #{tpu_custom_call.1} parent=1 // pred_region
      %s39 = ssub.s32 1024, 1024
      %40 = vsyncadd [#allocation6], %s39
      %s41 = sshll.u32 [#allocation7], 4
      %s42 = int_to_ptr.vmem [resolvable:$true] %s41
      %47 = dma.hbm_to_vmem [thread:$0]  %s2, 1024, %s42, [#allocation6], 64, 64, 4
    $region13: #{tpu_custom_call.1} parent=1 // pred_fallthru
      _
    // Predicated region
    $region14: #{tpu_custom_call.1} parent=1 // pred_check
      _
    $region15: #{tpu_custom_call.1} parent=1 // pred_check_branch
      %49 = sbr.rel (0) target = $region17
    $region16: #{tpu_custom_call.1} parent=1 // pred_region
      %s51 = ssub.s32 1024, 1024
      %52 = vsyncadd [#allocation9], %s51
      %s53 = sshll.u32 [#allocation8], 4
      %s54 = int_to_ptr.vmem [resolvable:$true] %s53
      %59 = dma.hbm_to_vmem [thread:$0]  %s3, 1024, %s54, [#allocation9], 64, 64, 4
    $region17: #{tpu_custom_call.1} parent=1 // pred_fallthru
      _
    // Predicated region
    $region18: #{tpu_custom_call.1} parent=1 // pred_check
      _
    $region19: #{tpu_custom_call.1} parent=1 // pred_check_branch
      %61 = sbr.rel (0) target = $region21
    $region20: #{tpu_custom_call.1} parent=1 // pred_region
      _
    $region21: #{tpu_custom_call.1} parent=1 // pred_fallthru
      _
    // Predicated region
    $region22: #{tpu_custom_call.1} parent=1 // pred_check
      _
    $region23: #{tpu_custom_call.1} parent=1 // pred_check_branch
      %63 = sbr.rel (0) target = $region25
    $region24: #{tpu_custom_call.1} parent=1 // pred_region
      %64 = dma.done [#allocation3], 128
    $region25: #{tpu_custom_call.1} parent=1 // pred_fallthru
      _
    // Predicated region
    $region26: #{tpu_custom_call.1} parent=1 // pred_check
      _
    $region27: #{tpu_custom_call.1} parent=1 // pred_check_branch
      %66 = sbr.rel (0) target = $region29
    $region28: #{tpu_custom_call.1} parent=1 // pred_region
      %67 = dma.done [#allocation6], 320
    $region29: #{tpu_custom_call.1} parent=1 // pred_fallthru
      _
    // Predicated region
    $region30: #{tpu_custom_call.1} parent=1 // pred_check
      _
    $region31: #{tpu_custom_call.1} parent=1 // pred_check_branch
      %69 = sbr.rel (0) target = $region33
    $region32: #{tpu_custom_call.1} parent=1 // pred_region
      %70 = dma.done [#allocation6], 1024
    $region33: #{tpu_custom_call.1} parent=1 // pred_fallthru
      _
    // Predicated region
    $region34: #{tpu_custom_call.1} parent=1 // pred_check
      _
    $region35: #{tpu_custom_call.1} parent=1 // pred_check_branch
      %72 = sbr.rel (0) target = $region37
    $region36: #{tpu_custom_call.1} parent=1 // pred_region
      %73 = dma.done [#allocation9], 1024
    $region37: #{tpu_custom_call.1} parent=1 // pred_fallthru
      _
    %v75 = vld [vmem:[#allocation2] sm:$0xff]
    %v76 = vpack.c.bf16 %v75, %v75
    %v77 = vld [vmem:[%s4] sm:$0x1]
    %v78 = vld [vmem:[%s4 + $0x1] sm:$0x1]
    %v79 = vld [vmem:[%s4 + $0x2] sm:$0x1]
    %v80 = vld [vmem:[#allocation5] sm:$0xf]
    %v81 = vld [vmem:[#allocation5 + $0x4] sm:$0xf]
    %v82 = vld [vmem:[#allocation5 + $0x8] sm:$0xf]
    %v83 = vld [vmem:[#allocation5 + $0xc] sm:$0xf]
    %v84 = vld [vmem:[#allocation5 + $0x10] sm:$0xf]
    %v85 = vlaneseq
    %v86 = vshrl.u32 %v85, 7
    %v87 = vsub.s32 0, %v86
    %v88 = vrot.slane %v77, %v87
    %v94 = vunpack.c.l.b16 %v80
    %v95 = vunpack.c.l.b16 %v81
    %v96 = vunpack.c.l.b16 %v82
    %v97 = vunpack.c.l.b16 %v83
    %v98 = vunpack.c.l.b16 %v84
    %v99 = vpack.c.b16 %v95, %v94
    %v100 = vpack.c.b16 %v97, %v96
    %v101 = vpack.c.b16 %v98, %v98
    %vm104 = vcmask 326656
    %v106 = vsel %vm104, %v76, 0
    %vm108 = vcmask 1043456
    %v110 = vsel %vm108, %v101, 0
    %112 = vmatprep.subr.bf16.mxu0 0
    %113 = vmatpush1.bf16.msra.mxu0 %v99
    %114 = vmatprep.subr.bf16.mxu0 0
    %115 = vmatpush1.bf16.msra.mxu0 %v100
    %116 = vmatprep.subr.bf16.mxu0 0
    %117 = vmatpush1.bf16.msra.mxu0 %v110
    %118 = vmatprep.subr.bf16.mxu0 0
    %119 = vmatpush1.bf16.msra.mxu0 0
    %120 = vmatprep.subr.bf16.mxu0 0
    %121 = vmatpush1.bf16.msra.mxu0 0
    %122 = vmatprep.subr.bf16.mxu0 0
    %123 = vmatpush1.bf16.msra.mxu0 0
    %124 = vmatprep.subr.bf16.mxu0 0
    %125 = vmatpush1.bf16.msra.mxu0 0
    %126 = vmatprep.subr.bf16.mxu0 0
    %127 = vmatpush1.bf16.msra.mxu0 0
    %128 = vmatprep.subr.bf16.mxu0 0
    %129 = vmatpush1.bf16.msra.mxu0 0
    %130 = vmatprep.subr.bf16.mxu0 0
    %131 = vmatpush1.bf16.msra.mxu0 0
    %132 = vmatprep.subr.bf16.mxu0 0
    %133 = vmatpush1.bf16.msra.mxu0 0
    %134 = vmatprep.subr.bf16.mxu0 0
    %135 = vmatpush1.bf16.msra.mxu0 0
    %136 = vmatprep.subr.bf16.mxu0 0
    %137 = vmatpush1.bf16.msra.mxu0 0
    %138 = vmatprep.subr.bf16.mxu0 0
    %139 = vmatpush1.bf16.msra.mxu0 0
    %140 = vmatprep.subr.bf16.mxu0 0
    %141 = vmatpush1.bf16.msra.mxu0 0
    %142 = vmatprep.subr.bf16.mxu0 0
    %143 = vmatpush1.bf16.msra.mxu0 0
    %144 = vmatprep.mubr.bf16.mxu0 0
    %145 = vmatmul.mubr.bf16.gmra.mrb[0].mxu0 %v106
    %v146 = vpop.f32.mrb[0].mxu0
    %v147 = vadd.f32 %v88, %v146
    %v148 = vpop.f32.mrb[0].mxu0
    %v149 = vpop.f32.mrb[0].mxu0
    %v150 = vpop.f32.mrb[0].mxu0
    %151 = vdwg.mxu0
    %v152 = vmax.f32 %v147, 0.0
    %v153 = vpack.c.bf16 %v152, %v152
    %v154 = vld [vmem:[#allocation7] sm:$0xf]
    %v155 = vld [vmem:[#allocation7 + $0x4] sm:$0xf]
    %v156 = vld [vmem:[#allocation7 + $0x8] sm:$0xf]
    %v157 = vld [vmem:[#allocation7 + $0xc] sm:$0xf]
    %v158 = vld [vmem:[#allocation7 + $0x10] sm:$0xf]
    %v159 = vld [vmem:[#allocation7 + $0x14] sm:$0xf]
    %v160 = vld [vmem:[#allocation7 + $0x18] sm:$0xf]
    %v161 = vld [vmem:[#allocation7 + $0x1c] sm:$0xf]
    %v162 = vld [vmem:[#allocation7 + $0x20] sm:$0xf]
    %v163 = vld [vmem:[#allocation7 + $0x24] sm:$0xf]
    %v164 = vld [vmem:[#allocation7 + $0x28] sm:$0xf]
    %v165 = vld [vmem:[#allocation7 + $0x2c] sm:$0xf]
    %v166 = vld [vmem:[#allocation7 + $0x30] sm:$0xf]
    %v167 = vld [vmem:[#allocation7 + $0x34] sm:$0xf]
    %v168 = vld [vmem:[#allocation7 + $0x38] sm:$0xf]
    %v169 = vld [vmem:[#allocation7 + $0x3c] sm:$0xf]
    %v170 = vlaneseq
    %v171 = vshrl.u32 %v170, 7
    %v172 = vsub.s32 0, %v171
    %v173 = vrot.slane %v78, %v172
    %v190 = vunpack.c.l.b16 %v154
    %v191 = vunpack.c.l.b16 %v155
    %v192 = vunpack.c.l.b16 %v156
    %v193 = vunpack.c.l.b16 %v157
    %v194 = vunpack.c.l.b16 %v158
    %v195 = vunpack.c.l.b16 %v159
    %v196 = vunpack.c.l.b16 %v160
    %v197 = vunpack.c.l.b16 %v161
    %v198 = vunpack.c.l.b16 %v162
    %v199 = vunpack.c.l.b16 %v163
    %v200 = vunpack.c.l.b16 %v164
    %v201 = vunpack.c.l.b16 %v165
    %v202 = vunpack.c.l.b16 %v166
    %v203 = vunpack.c.l.b16 %v167
    %v204 = vunpack.c.l.b16 %v168
    %v205 = vunpack.c.l.b16 %v169
    %v206 = vpack.c.b16 %v191, %v190
    %v207 = vpack.c.b16 %v193, %v192
    %v208 = vpack.c.b16 %v195, %v194
    %v209 = vpack.c.b16 %v197, %v196
    %v210 = vpack.c.b16 %v199, %v198
    %v211 = vpack.c.b16 %v201, %v200
    %v212 = vpack.c.b16 %v203, %v202
    %v213 = vpack.c.b16 %v205, %v204
    %222 = vmatprep.subr.bf16.mxu0 0
    %223 = vmatpush1.bf16.msra.mxu0 %v206
    %224 = vmatprep.subr.bf16.mxu0 0
    %225 = vmatpush1.bf16.msra.mxu0 %v207
    %226 = vmatprep.subr.bf16.mxu0 0
    %227 = vmatpush1.bf16.msra.mxu0 %v208
    %228 = vmatprep.subr.bf16.mxu0 0
    %229 = vmatpush1.bf16.msra.mxu0 %v209
    %230 = vmatprep.subr.bf16.mxu0 0
    %231 = vmatpush1.bf16.msra.mxu0 %v210
    %232 = vmatprep.subr.bf16.mxu0 0
    %233 = vmatpush1.bf16.msra.mxu0 %v211
    %234 = vmatprep.subr.bf16.mxu0 0
    %235 = vmatpush1.bf16.msra.mxu0 %v212
    %236 = vmatprep.subr.bf16.mxu0 0
    %237 = vmatpush1.bf16.msra.mxu0 %v213
    %238 = vmatprep.subr.bf16.mxu0 0
    %239 = vmatpush1.bf16.msra.mxu0 0
    %240 = vmatprep.subr.bf16.mxu0 0
    %241 = vmatpush1.bf16.msra.mxu0 0
    %242 = vmatprep.subr.bf16.mxu0 0
    %243 = vmatpush1.bf16.msra.mxu0 0
    %244 = vmatprep.subr.bf16.mxu0 0
    %245 = vmatpush1.bf16.msra.mxu0 0
    %246 = vmatprep.subr.bf16.mxu0 0
    %247 = vmatpush1.bf16.msra.mxu0 0
    %248 = vmatprep.subr.bf16.mxu0 0
    %249 = vmatpush1.bf16.msra.mxu0 0
    %250 = vmatprep.subr.bf16.mxu0 0
    %251 = vmatpush1.bf16.msra.mxu0 0
    %252 = vmatprep.subr.bf16.mxu0 0
    %253 = vmatpush1.bf16.msra.mxu0 0
    %254 = vmatprep.mubr.bf16.mxu0 0
    %255 = vmatmul.mubr.bf16.gmra.mrb[0].mxu0 %v153
    %v256 = vpop.f32.mrb[0].mxu0
    %v257 = vadd.f32 %v173, %v256
    %v258 = vpop.f32.mrb[0].mxu0
    %v259 = vpop.f32.mrb[0].mxu0
    %v260 = vpop.f32.mrb[0].mxu0
    %261 = vdwg.mxu0
    %v262 = vmax.f32 %v257, 0.0
    %v263 = vpack.c.bf16 %v262, %v262
    %v264 = vld [vmem:[#allocation8] sm:$0xf]
    %v265 = vld [vmem:[#allocation8 + $0x4] sm:$0xf]
    %v266 = vld [vmem:[#allocation8 + $0x8] sm:$0xf]
    %v267 = vld [vmem:[#allocation8 + $0xc] sm:$0xf]
    %v268 = vld [vmem:[#allocation8 + $0x10] sm:$0xf]
    %v269 = vld [vmem:[#allocation8 + $0x14] sm:$0xf]
    %v270 = vld [vmem:[#allocation8 + $0x18] sm:$0xf]
    %v271 = vld [vmem:[#allocation8 + $0x1c] sm:$0xf]
    %v272 = vld [vmem:[#allocation8 + $0x20] sm:$0xf]
    %v273 = vld [vmem:[#allocation8 + $0x24] sm:$0xf]
    %v274 = vld [vmem:[#allocation8 + $0x28] sm:$0xf]
    %v275 = vld [vmem:[#allocation8 + $0x2c] sm:$0xf]
    %v276 = vld [vmem:[#allocation8 + $0x30] sm:$0xf]
    %v277 = vld [vmem:[#allocation8 + $0x34] sm:$0xf]
    %v278 = vld [vmem:[#allocation8 + $0x38] sm:$0xf]
    %v279 = vld [vmem:[#allocation8 + $0x3c] sm:$0xf]
    %v280 = vlaneseq
    %v281 = vshrl.u32 %v280, 7
    %v282 = vsub.s32 0, %v281
    %v283 = vrot.slane %v79, %v282
    %v300 = vunpack.c.l.b16 %v264
    %v301 = vunpack.c.l.b16 %v265
    %v302 = vunpack.c.l.b16 %v266
    %v303 = vunpack.c.l.b16 %v267
    %v304 = vunpack.c.l.b16 %v268
    %v305 = vunpack.c.l.b16 %v269
    %v306 = vunpack.c.l.b16 %v270
    %v307 = vunpack.c.l.b16 %v271
    %v308 = vunpack.c.l.b16 %v272
    %v309 = vunpack.c.l.b16 %v273
    %v310 = vunpack.c.l.b16 %v274
    %v311 = vunpack.c.l.b16 %v275
    %v312 = vunpack.c.l.b16 %v276
    %v313 = vunpack.c.l.b16 %v277
    %v314 = vunpack.c.l.b16 %v278
    %v315 = vunpack.c.l.b16 %v279
    %v316 = vpack.c.b16 %v301, %v300
    %v317 = vpack.c.b16 %v303, %v302
    %v318 = vpack.c.b16 %v305, %v304
    %v319 = vpack.c.b16 %v307, %v306
    %v320 = vpack.c.b16 %v309, %v308
    %v321 = vpack.c.b16 %v311, %v310
    %v322 = vpack.c.b16 %v313, %v312
    %v323 = vpack.c.b16 %v315, %v314
    %332 = vmatprep.subr.bf16.mxu0 0
    %333 = vmatpush1.bf16.msra.mxu0 %v316
    %334 = vmatprep.subr.bf16.mxu0 0
    %335 = vmatpush1.bf16.msra.mxu0 %v317
    %336 = vmatprep.subr.bf16.mxu0 0
    %337 = vmatpush1.bf16.msra.mxu0 %v318
    %338 = vmatprep.subr.bf16.mxu0 0
    %339 = vmatpush1.bf16.msra.mxu0 %v319
    %340 = vmatprep.subr.bf16.mxu0 0
    %341 = vmatpush1.bf16.msra.mxu0 %v320
    %342 = vmatprep.subr.bf16.mxu0 0
    %343 = vmatpush1.bf16.msra.mxu0 %v321
    %344 = vmatprep.subr.bf16.mxu0 0
    %345 = vmatpush1.bf16.msra.mxu0 %v322
    %346 = vmatprep.subr.bf16.mxu0 0
    %347 = vmatpush1.bf16.msra.mxu0 %v323
    %348 = vmatprep.subr.bf16.mxu0 0
    %349 = vmatpush1.bf16.msra.mxu0 0
    %350 = vmatprep.subr.bf16.mxu0 0
    %351 = vmatpush1.bf16.msra.mxu0 0
    %352 = vmatprep.subr.bf16.mxu0 0
    %353 = vmatpush1.bf16.msra.mxu0 0
    %354 = vmatprep.subr.bf16.mxu0 0
    %355 = vmatpush1.bf16.msra.mxu0 0
    %356 = vmatprep.subr.bf16.mxu0 0
    %357 = vmatpush1.bf16.msra.mxu0 0
    %358 = vmatprep.subr.bf16.mxu0 0
    %359 = vmatpush1.bf16.msra.mxu0 0
    %360 = vmatprep.subr.bf16.mxu0 0
    %361 = vmatpush1.bf16.msra.mxu0 0
    %362 = vmatprep.subr.bf16.mxu0 0
    %363 = vmatpush1.bf16.msra.mxu0 0
    %364 = vmatprep.mubr.bf16.mxu0 0
    %365 = vmatmul.mubr.bf16.gmra.mrb[0].mxu0 %v263
    %v366 = vpop.f32.mrb[0].mxu0
    %v367 = vadd.f32 %v283, %v366
    %v368 = vpop.f32.mrb[0].mxu0
    %v369 = vpop.f32.mrb[0].mxu0
    %v370 = vpop.f32.mrb[0].mxu0
    %371 = vdwg.mxu0
    %v372 = vpack.c.bf16 %v367, %v367
    %374 = vrot.lane.b32.xlu0 %v372, 64
    %v375 = vpop.permute.xlu0 %374
    %vm376 = vcmask 261120
    %v378 = vsel %vm376, %v372, 0
    %v381 = vsel %vm376, %v375, 0
    %383 = vmatprep.subr.bf16.mxu0 0
    %384 = vmatpush1.bf16.xpose.msra.mxu0 %v381
    %385 = vmatprep.subr.bf16.mxu0 0
    %386 = vmatpush1.bf16.xpose.msra.mxu0 0
    %387 = vmatprep.subr.bf16.mxu0 0
    %388 = vmatpush1.bf16.xpose.msra.mxu0 0
    %389 = vmatprep.subr.bf16.mxu0 0
    %390 = vmatpush1.bf16.xpose.msra.mxu0 0
    %391 = vmatprep.subr.bf16.mxu0 0
    %392 = vmatpush1.bf16.xpose.msra.mxu0 0
    %393 = vmatprep.subr.bf16.mxu0 0
    %394 = vmatpush1.bf16.xpose.msra.mxu0 0
    %395 = vmatprep.subr.bf16.mxu0 0
    %396 = vmatpush1.bf16.xpose.msra.mxu0 0
    %397 = vmatprep.subr.bf16.mxu0 0
    %398 = vmatpush1.bf16.xpose.msra.mxu0 0
    %399 = vmatprep.subr.bf16.mxu0 0
    %400 = vmatpush1.bf16.xpose.msra.mxu0 0
    %401 = vmatprep.subr.bf16.mxu0 0
    %402 = vmatpush1.bf16.xpose.msra.mxu0 0
    %403 = vmatprep.subr.bf16.mxu0 0
    %404 = vmatpush1.bf16.xpose.msra.mxu0 0
    %405 = vmatprep.subr.bf16.mxu0 0
    %406 = vmatpush1.bf16.xpose.msra.mxu0 0
    %407 = vmatprep.subr.bf16.mxu0 0
    %408 = vmatpush1.bf16.xpose.msra.mxu0 0
    %409 = vmatprep.subr.bf16.mxu0 0
    %410 = vmatpush1.bf16.xpose.msra.mxu0 0
    %411 = vmatprep.subr.bf16.mxu0 0
    %412 = vmatpush1.bf16.xpose.msra.mxu0 0
    %413 = vmatprep.subr.bf16.mxu0 0
    %414 = vmatpush1.bf16.xpose.msra.mxu0 0
    %415 = vmatprep.mubr.bf16.mxu0 0
    %416 = vmatmul.mubr.bf16.gmra.mrb[0].mxu0 %v378
    %v417 = vpop.f32.mrb[0].mxu0
    %v418 = vadd.f32 0.0, %v417
    %v419 = vpop.f32.mrb[0].mxu0
    %v420 = vpop.f32.mrb[0].mxu0
    %v421 = vpop.f32.mrb[0].mxu0
    %422 = vdwg.mxu0
    %vm423 = vcmask 64512
    %424 = vst.msk [vmem:[#allocation10] sm:$0xff] %vm423, %v418
    %425 = vrot.lane.b32.xlu0 %v372, 96
    %v426 = vpop.permute.xlu0 %425
    %427 = vrot.lane.b32.xlu0 %v372, 32
    %v428 = vpop.permute.xlu0 %427
    %v430 = vsel %vm376, %v426, 0
    %v433 = vsel %vm376, %v428, 0
    %435 = vmatprep.subr.bf16.mxu0 0
    %436 = vmatpush1.bf16.xpose.msra.mxu0 %v433
    %437 = vmatprep.subr.bf16.mxu0 0
    %438 = vmatpush1.bf16.xpose.msra.mxu0 0
    %439 = vmatprep.subr.bf16.mxu0 0
    %440 = vmatpush1.bf16.xpose.msra.mxu0 0
    %441 = vmatprep.subr.bf16.mxu0 0
    %442 = vmatpush1.bf16.xpose.msra.mxu0 0
    %443 = vmatprep.subr.bf16.mxu0 0
    %444 = vmatpush1.bf16.xpose.msra.mxu0 0
    %445 = vmatprep.subr.bf16.mxu0 0
    %446 = vmatpush1.bf16.xpose.msra.mxu0 0
    %447 = vmatprep.subr.bf16.mxu0 0
    %448 = vmatpush1.bf16.xpose.msra.mxu0 0
    %449 = vmatprep.subr.bf16.mxu0 0
    %450 = vmatpush1.bf16.xpose.msra.mxu0 0
    %451 = vmatprep.subr.bf16.mxu0 0
    %452 = vmatpush1.bf16.xpose.msra.mxu0 0
    %453 = vmatprep.subr.bf16.mxu0 0
    %454 = vmatpush1.bf16.xpose.msra.mxu0 0
    %455 = vmatprep.subr.bf16.mxu0 0
    %456 = vmatpush1.bf16.xpose.msra.mxu0 0
    %457 = vmatprep.subr.bf16.mxu0 0
    %458 = vmatpush1.bf16.xpose.msra.mxu0 0
    %459 = vmatprep.subr.bf16.mxu0 0
    %460 = vmatpush1.bf16.xpose.msra.mxu0 0
    %461 = vmatprep.subr.bf16.mxu0 0
    %462 = vmatpush1.bf16.xpose.msra.mxu0 0
    %463 = vmatprep.subr.bf16.mxu0 0
    %464 = vmatpush1.bf16.xpose.msra.mxu0 0
    %465 = vmatprep.subr.bf16.mxu0 0
    %466 = vmatpush1.bf16.xpose.msra.mxu0 0
    %467 = vmatprep.mubr.bf16.mxu0 0
    %468 = vmatmul.mubr.bf16.gmra.mrb[0].mxu0 %v430
    %v469 = vpop.f32.mrb[0].mxu0
    %v470 = vadd.f32 0.0, %v469
    %v471 = vpop.f32.mrb[0].mxu0
    %v472 = vpop.f32.mrb[0].mxu0
    %v473 = vpop.f32.mrb[0].mxu0
    %474 = vdwg.mxu0
    %s475 = scalar_lea.vmem [#allocation10], 8
    %476 = vst.msk [vmem:[%s475] sm:$0xff] %vm423, %v470
    // Predicated region
    $region38: #{tpu_custom_call.1} parent=1 // pred_check
      _
    $region39: #{tpu_custom_call.1} parent=1 // pred_check_branch
      %478 = sbr.rel (0) target = $region41
    $region40: #{tpu_custom_call.1} parent=1 // pred_region
      %s480 = ssub.s32 256, 256
      %481 = vsyncadd [#allocation4], %s480
      %s482 = sshll.u32 [#allocation10], 4
      %s483 = int_to_ptr.vmem [resolvable:$true] %s482
      %488 = dma.vmem_to_hbm [thread:$0]  %s483, 256, %s5, [#allocation4], 128, 128, 8
    $region41: #{tpu_custom_call.1} parent=1 // pred_fallthru
      _
    // Predicated region
    $region42: #{tpu_custom_call.1} parent=1 // pred_check
      _
    $region43: #{tpu_custom_call.1} parent=1 // pred_check_branch
      %490 = sbr.rel (0) target = $region45
    $region44: #{tpu_custom_call.1} parent=1 // pred_region
      %491 = dma.done [#allocation4], 256
    $region45: #{tpu_custom_call.1} parent=1 // pred_fallthru
      _
    %492 = vsyncpa [#allocation3], 1
    %493 = vsyncpa [#allocation6], 1
    %494 = vsyncpa [#allocation9], 1
    %495 = vsyncpa [#allocation4], 1

</llo_original>
